<compile_context>
chip_gen: v7x
topology: tpu7x:2x2x1
jax: 0.10.0
libtpu: 0.0.40
codegen_flags: <defaults>
</compile_context>

<pallas_src>
import functools

import jax
import jax.numpy as jnp
from jax.experimental import pallas as pl
from jax.experimental.pallas import tpu as pltpu


def linregnet_kernel(x_ref, w1_ref, b1_ref, w2_ref, b2_ref, o_ref, *, num_class):
    # fc1: MXU matmul with f32 accumulation, bias + ReLU epilogue on the VPU.
    h = jnp.dot(x_ref[...], w1_ref[...], preferred_element_type=jnp.float32)
    h = jnp.maximum(h + b1_ref[...], 0.0)
    # fc2 against the lane-padded (E, Cp) weight; keep activations in f32
    # (no implicit downcast even if the stored weights were narrower).
    out = jnp.dot(h, w2_ref[...].astype(jnp.float32),
                  preferred_element_type=jnp.float32)
    out = out + b2_ref[...].astype(jnp.float32)
    # Store only the real classes; padded MXU columns never touch HBM.
    o_ref[...] = out[:, :num_class].astype(o_ref.dtype)


def _round_up(n, m):
    return ((n + m - 1) // m) * m


def _choose_block_b(B, target_steps=2, max_rows=1024):
    """Pick a batch tile: ~target_steps (even) grid steps, sublane-legal size."""
    if B <= 8:
        # A block equal to the full dim is always legal, grid = 1.
        return B
    bb = _round_up(pl.cdiv(B, target_steps), 8)
    return min(bb, max_rows, _round_up(B, 8))


def linregnet_forward(x, w1, b1, w2, b2, *, block_b=None):
    """x: (B, F); w1: (F, E); b1: (1, E); w2: (E, C); b2: (1, C) -> (B, C)."""
    B, F = x.shape
    E = w1.shape[1]
    C = w2.shape[1]

    # Lane-pad only the (tiny, weight-sized) second-layer params so the MXU rhs
    # is a full 128-lane tile; the padded columns are sliced off in-kernel.
    Cp = _round_up(max(C, 128), 128)
    w2p = jnp.pad(w2, ((0, 0), (0, Cp - C)))
    b2p = jnp.pad(b2, ((0, 0), (0, Cp - C)))

    if block_b is None:
        block_b = _choose_block_b(B)
    grid = (pl.cdiv(B, block_b),)  # partial last block handled by Pallas

    itemsize = jnp.dtype(x.dtype).itemsize
    cost = pl.CostEstimate(
        flops=2 * B * (F * E + E * Cp),
        transcendentals=0,
        bytes_accessed=itemsize * (B * F + F * E + E + E * Cp + Cp + B * C),
    )

    return pl.pallas_call(
        functools.partial(linregnet_kernel, num_class=C),
        out_shape=jax.ShapeDtypeStruct((B, C), x.dtype),
        grid_spec=pltpu.PrefetchScalarGridSpec(
            num_scalar_prefetch=0,
            grid=grid,
            in_specs=[
                # Batch-tiled activations: auto double-buffered across steps.
                pl.BlockSpec((block_b, F), lambda i: (i, 0)),
                # Weights / biases: constant block index -> fetched once, resident.
                pl.BlockSpec((F, E), lambda i: (0, 0)),
                pl.BlockSpec((1, E), lambda i: (0, 0)),
                pl.BlockSpec((E, Cp), lambda i: (0, 0)),
                pl.BlockSpec((1, Cp), lambda i: (0, 0)),
            ],
            # Unpadded output: last dim C equals the full array dim (legal even
            # though C < 128), so no padded columns are written back.
            out_specs=pl.BlockSpec((block_b, C), lambda i: (i, 0)),
        ),
        compiler_params=pltpu.CompilerParams(
            # Batch axis is embarrassingly parallel -> shards across v7x's 2 TCs;
            # harmless on v5e/v6e (single TC).
            dimension_semantics=("parallel",),
        ),
        cost_estimate=cost,
    )(x, w1, b1, w2p, b2p)


def init_params(key, num_feather, num_embed, num_class, dtype=jnp.float32):
    """Init mimicking PyTorch nn.Linear default U(-1/sqrt(fan_in), +1/sqrt(fan_in))."""
    k1, k2, k3, k4 = jax.random.split(key, 4)
    bound1 = 1.0 / jnp.sqrt(num_feather)
    bound2 = 1.0 / jnp.sqrt(num_embed)
    # Stored as (in, out) == transpose of PyTorch's (out, in) weight.
    w1 = jax.random.uniform(k1, (num_feather, num_embed), dtype, -bound1, bound1)
    b1 = jax.random.uniform(k2, (1, num_embed), dtype, -bound1, bound1)
    w2 = jax.random.uniform(k3, (num_embed, num_class), dtype, -bound2, bound2)
    b2 = jax.random.uniform(k4, (1, num_class), dtype, -bound2, bound2)
    return w1, b1, w2, b2


if __name__ == "__main__":
    # Small model dims; batch=256 gives a 2-step (even) batch grid of 128-row tiles.
    batch, num_feather, num_embed, num_class = 256, 32, 32, 16

    key = jax.random.PRNGKey(0)
    kx, kp = jax.random.split(key)
    x = jax.random.normal(kx, (batch, num_feather), jnp.float32)
    w1, b1, w2, b2 = init_params(kp, num_feather, num_embed, num_class)

    fwd = jax.jit(linregnet_forward)

    out = fwd(x, w1, b1, w2, b2)
    jax.block_until_ready(out)

    # Reference check in plain JAX (same math, f32 throughout).
    ref = jnp.maximum(x @ w1 + b1, 0.0) @ w2 + b2
    assert out.shape == (batch, num_class)
    assert jnp.allclose(out, ref, atol=1e-5, rtol=1e-5)

    # Ragged batch: exercised via the cdiv grid / partial last block
    # (no wrapper padding, no wasted DMA or matmul work).
    out_small = fwd(x[:8], w1, b1, w2, b2)
    jax.block_until_ready(out_small)
    assert out_small.shape == (8, num_class)
    assert jnp.allclose(out_small, ref[:8], atol=1e-5, rtol=1e-5)

    print("KERNEL_OK")
</pallas_src>

<mosaic_0001>
module attributes {stable_mosaic.version = 11 : i64} {
  func.func @linregnet_kernel(%arg0: i32, %arg1: memref<128x32xf32, #tpu.memory_space<vmem>>, %arg2: memref<32x32xf32, #tpu.memory_space<vmem>>, %arg3: memref<1x32xf32, #tpu.memory_space<vmem>>, %arg4: memref<32x128xf32, #tpu.memory_space<vmem>>, %arg5: memref<1x128xf32, #tpu.memory_space<vmem>>, %arg6: memref<128x16xf32, #tpu.memory_space<vmem>>) attributes {dimension_semantics = [#tpu.dimension_semantics<parallel>], iteration_bounds = array<i64: 2>, scalar_prefetch = 0 : i64, scratch_operands = 0 : i64, tpu.core_type = #tpu.core_type<tc>, window_params = [{transform_indices = @transform_0, window_bounds = array<i64: 128, 32>}, {pipeline_mode = #tpu.pipeline_mode<synchronous>, transform_indices = @transform_1, window_bounds = array<i64: 32, 32>}, {pipeline_mode = #tpu.pipeline_mode<synchronous>, transform_indices = @transform_2, window_bounds = array<i64: 1, 32>}, {pipeline_mode = #tpu.pipeline_mode<synchronous>, transform_indices = @transform_3, window_bounds = array<i64: 32, 128>}, {pipeline_mode = #tpu.pipeline_mode<synchronous>, transform_indices = @transform_4, window_bounds = array<i64: 1, 128>}, {transform_indices = @transform_5, window_bounds = array<i64: 128, 16>}]} {
    %c0 = arith.constant 0 : index
    %c0_0 = arith.constant 0 : index
    %0 = vector.load %arg1[%c0, %c0_0] : memref<128x32xf32, #tpu.memory_space<vmem>>, vector<128x32xf32>
    %c0_1 = arith.constant 0 : index
    %c0_2 = arith.constant 0 : index
    %1 = vector.load %arg2[%c0_1, %c0_2] : memref<32x32xf32, #tpu.memory_space<vmem>>, vector<32x32xf32>
    %cst = arith.constant dense<0.000000e+00> : vector<128x32xf32>
    %2 = tpu.matmul %0, %1, %cst {dimension_numbers = #tpu.dot_dimension_numbers<[1], [0], [0], [1], [0, 0, 1, 1], [], []>} : vector<128x32xf32>, vector<32x32xf32>, vector<128x32xf32> -> vector<128x32xf32>
    %c0_3 = arith.constant 0 : index
    %c0_4 = arith.constant 0 : index
    %3 = vector.load %arg3[%c0_3, %c0_4] : memref<1x32xf32, #tpu.memory_space<vmem>>, vector<1x32xf32>
    %4 = vector.broadcast %3 : vector<1x32xf32> to vector<128x32xf32>
    %5 = arith.addf %2, %4 : vector<128x32xf32>
    %cst_5 = arith.constant 0.000000e+00 : f32
    %6 = vector.broadcast %cst_5 : f32 to vector<128x32xf32>
    %7 = arith.maximumf %5, %6 : vector<128x32xf32>
    %c0_6 = arith.constant 0 : index
    %c0_7 = arith.constant 0 : index
    %8 = vector.load %arg4[%c0_6, %c0_7] : memref<32x128xf32, #tpu.memory_space<vmem>>, vector<32x128xf32>
    %cst_8 = arith.constant dense<0.000000e+00> : vector<128x128xf32>
    %9 = tpu.matmul %7, %8, %cst_8 {dimension_numbers = #tpu.dot_dimension_numbers<[1], [0], [0], [1], [0, 0, 1, 1], [], []>} : vector<128x32xf32>, vector<32x128xf32>, vector<128x128xf32> -> vector<128x128xf32>
    %c0_9 = arith.constant 0 : index
    %c0_10 = arith.constant 0 : index
    %10 = vector.load %arg5[%c0_9, %c0_10] : memref<1x128xf32, #tpu.memory_space<vmem>>, vector<1x128xf32>
    %11 = vector.broadcast %10 : vector<1x128xf32> to vector<128x128xf32>
    %12 = arith.addf %9, %11 : vector<128x128xf32>
    %13 = vector.extract_strided_slice %12 {offsets = [0, 0], sizes = [128, 16], strides = [1, 1]} : vector<128x128xf32> to vector<128x16xf32>
    %c0_11 = arith.constant 0 : index
    %c0_12 = arith.constant 0 : index
    %14 = vector.load %arg6[%c0_11, %c0_12] : memref<128x16xf32, #tpu.memory_space<vmem>>, vector<128x16xf32>
    tpu.vector_store %arg6[%c0_11, %c0_12], %13 {strides = array<i32>} : memref<128x16xf32, #tpu.memory_space<vmem>>, vector<128x16xf32>,
    return
  }
  func.func @transform_0(%arg0: i32) -> (i32, i32) {
    %c0_i32 = arith.constant 0 : i32
    %c0_i32_0 = arith.constant 0 : i32
    return %arg0, %c0_i32 : i32, i32
  }
  func.func @transform_1(%arg0: i32) -> (i32, i32) {
    %c0_i32 = arith.constant 0 : i32
    %c0_i32_0 = arith.constant 0 : i32
    %c0_i32_1 = arith.constant 0 : i32
    return %c0_i32, %c0_i32_0 : i32, i32
  }
  func.func @transform_2(%arg0: i32) -> (i32, i32) {
    %c0_i32 = arith.constant 0 : i32
    %c0_i32_0 = arith.constant 0 : i32
    %c0_i32_1 = arith.constant 0 : i32
    return %c0_i32, %c0_i32_0 : i32, i32
  }
  func.func @transform_3(%arg0: i32) -> (i32, i32) {
    %c0_i32 = arith.constant 0 : i32
    %c0_i32_0 = arith.constant 0 : i32
    %c0_i32_1 = arith.constant 0 : i32
    return %c0_i32, %c0_i32_0 : i32, i32
  }
  func.func @transform_4(%arg0: i32) -> (i32, i32) {
    %c0_i32 = arith.constant 0 : i32
    %c0_i32_0 = arith.constant 0 : i32
    %c0_i32_1 = arith.constant 0 : i32
    return %c0_i32, %c0_i32_0 : i32, i32
  }
  func.func @transform_5(%arg0: i32) -> (i32, i32) {
    %c0_i32 = arith.constant 0 : i32
    %c0_i32_0 = arith.constant 0 : i32
    return %arg0, %c0_i32 : i32, i32
  }
}

</mosaic_0001>

<llo_original>
// kernel: linregnet_forward.1
$region0: #{linregnet_forward.1}
  #allocation0 [shape = 'u32[]', space=smem, size = 0x4, offset = 0x4, fixed_abs, tag = 'smem constant byte address 0x4 - core index']
  #allocation1 [shape = 'u32[144,128]{1,0:T(1,128)}', space=vmem, size = 0x12000, scoped, tag = 'internal scratch']
  %s0 = inlined_call_operand.vmem [shape: f32[256,32], index: 0, kind: input, shape index: {}]
  %s1 = inlined_call_operand.vmem [shape: f32[32,32], index: 1, kind: input, shape index: {}]
  %s2 = inlined_call_operand.vmem [shape: f32[1,32], index: 2, kind: input, shape index: {}]
  %s3 = inlined_call_operand.vmem [shape: f32[32,128], index: 3, kind: input, shape index: {}]
  %s4 = inlined_call_operand.vmem [shape: f32[1,128], index: 4, kind: input, shape index: {}]
  %s5 = inlined_call_operand.vmem [shape: f32[256,16], index: 5, kind: output, shape index: {}]
  %s6 = sld [smem:[#allocation0]]
  $region53: #{linregnet_forward.1} parent=0
    _
  %s8 = ssub.s32 1, %s6
  %s9 = scalar_select 0, %s8, %s6
  loop: start=0, step=1, limit=4
  $region2: #{linregnet_forward.1} parent=0 // loop_pre_header
    _
  $region3: #{linregnet_forward.1} parent=0 // loop_header
    %s11 = sphi 0, %s15
    %p12 = scmp.ge.s32.totalorder %s11, 4
    %s21 = sphi 0, %s23
    %s24 = sphi 0, %s21
    %s25 = sphi 0, %s24
    %s41 = sphi 0, %s25
    %s45 = sphi 0, %s45
    %s47 = sphi 0, %s45
    %s48 = sphi 0, %s47
    %s62 = sphi 0, %s48
    %s66 = sphi 0, %s66
    %s68 = sphi 0, %s66
    %s69 = sphi 0, %s68
    %s83 = sphi 0, %s69
    %s87 = sphi 0, %s87
    %s89 = sphi 0, %s87
    %s90 = sphi 0, %s89
    %s104 = sphi 0, %s90
    %s108 = sphi 0, %s108
    %s110 = sphi 0, %s108
    %s111 = sphi 0, %s110
    %s125 = sphi 0, %s111
    %s131 = sphi 0, %s133
    %s134 = sphi 0, %s131
    %s135 = sphi 0, %s134
    %s151 = sphi 0, %s135
  $region4: #{linregnet_forward.1} parent=0 // loop_header_branch
    %14 = sbr.rel (%p12) target = $region8
  $region5: #{linregnet_forward.1} parent=0 // loop_body
    %s16 = ssub.s32 %s11, 1
    %s17 = ssub.s32 %s11, 2
    %s18 = sadd.s32 %s11, 1
    %s19 = ssub.s32 %s11, %s18
    %p20 = scmp.eq.s32.totalorder %s19, 0
    %s22 = sadd.s32 %s21, 1
    %s23 = scalar_select %p20, %s21, %s22
    %p26 = pneg %p20
    %p27 = scmp.eq.s32.totalorder %s11, 1
    %p28 = por %p26, %p27
    %p29 = scmp.ne.s32.totalorder %s21, %s24
    %p30 = scmp.eq.s32.totalorder %s11, 0
    %p31 = por %p29, %p30
    %p32 = scmp.ne.s32.totalorder %s21, %s24
    %p33 = scmp.eq.s32.totalorder %s16, 1
    %p34 = por %p32, %p33
    %p35 = scmp.ne.s32.totalorder %s24, %s25
    %p36 = scmp.eq.s32.totalorder %s16, 0
    %p37 = por %p35, %p36
    %p38 = scmp.ne.s32.totalorder %s24, %s25
    %p39 = scmp.eq.s32.totalorder %s17, 1
    %p40 = por %p38, %p39
    %p42 = scmp.ne.s32.totalorder %s25, %s41
    %p43 = scmp.eq.s32.totalorder %s17, 0
    %p44 = por %p42, %p43
    %s46 = sadd.s32 %s45, 1
    %p49 = scmp.eq.s32.totalorder %s11, 1
    %p50 = scmp.ne.s32.totalorder %s45, %s47
    %p51 = scmp.eq.s32.totalorder %s11, 0
    %p52 = por %p50, %p51
    %p53 = scmp.ne.s32.totalorder %s45, %s47
    %p54 = scmp.eq.s32.totalorder %s16, 1
    %p55 = por %p53, %p54
    %p56 = scmp.ne.s32.totalorder %s47, %s48
    %p57 = scmp.eq.s32.totalorder %s16, 0
    %p58 = por %p56, %p57
    %p59 = scmp.ne.s32.totalorder %s47, %s48
    %p60 = scmp.eq.s32.totalorder %s17, 1
    %p61 = por %p59, %p60
    %p63 = scmp.ne.s32.totalorder %s48, %s62
    %p64 = scmp.eq.s32.totalorder %s17, 0
    %p65 = por %p63, %p64
    %s67 = sadd.s32 %s66, 1
    %p70 = scmp.eq.s32.totalorder %s11, 1
    %p71 = scmp.ne.s32.totalorder %s66, %s68
    %p72 = scmp.eq.s32.totalorder %s11, 0
    %p73 = por %p71, %p72
    %p74 = scmp.ne.s32.totalorder %s66, %s68
    %p75 = scmp.eq.s32.totalorder %s16, 1
    %p76 = por %p74, %p75
    %p77 = scmp.ne.s32.totalorder %s68, %s69
    %p78 = scmp.eq.s32.totalorder %s16, 0
    %p79 = por %p77, %p78
    %p80 = scmp.ne.s32.totalorder %s68, %s69
    %p81 = scmp.eq.s32.totalorder %s17, 1
    %p82 = por %p80, %p81
    %p84 = scmp.ne.s32.totalorder %s69, %s83
    %p85 = scmp.eq.s32.totalorder %s17, 0
    %p86 = por %p84, %p85
    %s88 = sadd.s32 %s87, 1
    %p91 = scmp.eq.s32.totalorder %s11, 1
    %p92 = scmp.ne.s32.totalorder %s87, %s89
    %p93 = scmp.eq.s32.totalorder %s11, 0
    %p94 = por %p92, %p93
    %p95 = scmp.ne.s32.totalorder %s87, %s89
    %p96 = scmp.eq.s32.totalorder %s16, 1
    %p97 = por %p95, %p96
    %p98 = scmp.ne.s32.totalorder %s89, %s90
    %p99 = scmp.eq.s32.totalorder %s16, 0
    %p100 = por %p98, %p99
    %p101 = scmp.ne.s32.totalorder %s89, %s90
    %p102 = scmp.eq.s32.totalorder %s17, 1
    %p103 = por %p101, %p102
    %p105 = scmp.ne.s32.totalorder %s90, %s104
    %p106 = scmp.eq.s32.totalorder %s17, 0
    %p107 = por %p105, %p106
    %s109 = sadd.s32 %s108, 1
    %p112 = scmp.eq.s32.totalorder %s11, 1
    %p113 = scmp.ne.s32.totalorder %s108, %s110
    %p114 = scmp.eq.s32.totalorder %s11, 0
    %p115 = por %p113, %p114
    %p116 = scmp.ne.s32.totalorder %s108, %s110
    %p117 = scmp.eq.s32.totalorder %s16, 1
    %p118 = por %p116, %p117
    %p119 = scmp.ne.s32.totalorder %s110, %s111
    %p120 = scmp.eq.s32.totalorder %s16, 0
    %p121 = por %p119, %p120
    %p122 = scmp.ne.s32.totalorder %s110, %s111
    %p123 = scmp.eq.s32.totalorder %s17, 1
    %p124 = por %p122, %p123
    %p126 = scmp.ne.s32.totalorder %s111, %s125
    %p127 = scmp.eq.s32.totalorder %s17, 0
    %p128 = por %p126, %p127
    %s129 = ssub.s32 %s11, %s18
    %p130 = scmp.eq.s32.totalorder %s129, 0
    %s132 = sadd.s32 %s131, 1
    %s133 = scalar_select %p130, %s131, %s132
    %p136 = pneg %p130
    %p137 = scmp.eq.s32.totalorder %s11, 1
    %p138 = por %p136, %p137
    %p139 = scmp.ne.s32.totalorder %s131, %s134
    %p140 = scmp.eq.s32.totalorder %s11, 0
    %p141 = por %p139, %p140
    %p142 = scmp.ne.s32.totalorder %s131, %s134
    %p143 = scmp.eq.s32.totalorder %s16, 1
    %p144 = por %p142, %p143
    %p145 = scmp.ne.s32.totalorder %s134, %s135
    %p146 = scmp.eq.s32.totalorder %s16, 0
    %p147 = por %p145, %p146
    %p148 = scmp.ne.s32.totalorder %s134, %s135
    %p149 = scmp.eq.s32.totalorder %s17, 1
    %p150 = por %p148, %p149
    %p152 = scmp.ne.s32.totalorder %s135, %s151
    %p153 = scmp.eq.s32.totalorder %s17, 0
    %p154 = por %p152, %p153
    %p155 = scmp.le.s32.totalorder 1, %s11
    %p156 = scmp.lt.s32.totalorder %s11, 3
    %p157 = pnand %p155, %p156
    %p158 = pneg %p157
    // Predicated region
    $region9: #{linregnet_forward.1} parent=5 // pred_check
      _
    $region10: #{linregnet_forward.1} parent=5 // pred_check_branch
      %160 = sbr.rel (%p157) target = $region12
    $region11: #{linregnet_forward.1} parent=5 // pred_region
      %s161 = ssub.s32 %s11, 1
      // Predicated region
      $region13: #{linregnet_forward.1} parent=11 // pred_check
        %p162 = pneg %p58
      $region14: #{linregnet_forward.1} parent=11 // pred_check_branch
        %164 = sbr.rel (%p162) target = $region16
      $region15: #{linregnet_forward.1} parent=11 // pred_region
        _
      $region16: #{linregnet_forward.1} parent=11 // pred_fallthru
        _
      // Predicated region
      $region17: #{linregnet_forward.1} parent=11 // pred_check
        %p165 = pneg %p79
      $region18: #{linregnet_forward.1} parent=11 // pred_check_branch
        %167 = sbr.rel (%p165) target = $region20
      $region19: #{linregnet_forward.1} parent=11 // pred_region
        _
      $region20: #{linregnet_forward.1} parent=11 // pred_fallthru
        _
      // Predicated region
      $region21: #{linregnet_forward.1} parent=11 // pred_check
        %p168 = pneg %p100
      $region22: #{linregnet_forward.1} parent=11 // pred_check_branch
        %170 = sbr.rel (%p168) target = $region24
      $region23: #{linregnet_forward.1} parent=11 // pred_region
        _
      $region24: #{linregnet_forward.1} parent=11 // pred_fallthru
        _
      // Predicated region
      $region25: #{linregnet_forward.1} parent=11 // pred_check
        %p171 = pneg %p121
      $region26: #{linregnet_forward.1} parent=11 // pred_check_branch
        %173 = sbr.rel (%p171) target = $region28
      $region27: #{linregnet_forward.1} parent=11 // pred_region
        _
      $region28: #{linregnet_forward.1} parent=11 // pred_fallthru
        _
    $region12: #{linregnet_forward.1} parent=5 // pred_fallthru
      _
    %p174 = scmp.lt.s32.totalorder %s11, 2
    // Predicated region
    $region29: #{linregnet_forward.1} parent=5 // pred_check
      %p175 = pneg %p174
    $region30: #{linregnet_forward.1} parent=5 // pred_check_branch
      %177 = sbr.rel (%p175) target = $region32
    $region31: #{linregnet_forward.1} parent=5 // pred_region
      // Predicated region
      $region33: #{linregnet_forward.1} parent=31 // pred_check
        %p178 = pneg %p31
      $region34: #{linregnet_forward.1} parent=31 // pred_check_branch
        %180 = sbr.rel (%p178) target = $region36
      $region35: #{linregnet_forward.1} parent=31 // pred_region
        %s181 = smul.u32 16, %s11
        %p182 = scmp.lt.s32.totalorder %s181, 31
        %s183 = scalar_select %p182, %s181, 31
        %s184 = smul.addr %s183, 8
        %s185 = scalar_lea.vmem %s0, %s184
        %s186 = smul.u32 16, %s11
      $region36: #{linregnet_forward.1} parent=31 // pred_fallthru
        _
    $region32: #{linregnet_forward.1} parent=5 // pred_fallthru
      _
    %p187 = scmp.le.s32.totalorder 1, %s11
    %p188 = scmp.lt.s32.totalorder %s11, 3
    %p189 = pnand %p187, %p188
    %p190 = pneg %p189
    // Predicated region
    $region37: #{linregnet_forward.1} parent=5 // pred_check
      _
    $region38: #{linregnet_forward.1} parent=5 // pred_check_branch
      %192 = sbr.rel (%p189) target = $region40
    $region39: #{linregnet_forward.1} parent=5 // pred_region
      %s193 = ssub.s32 %s11, 1
      %s194 = smul.u32 16, %s16
      %p195 = scmp.lt.s32.totalorder %s194, 31
      %s196 = scalar_select %p195, %s194, 31
      %s197 = smul.addr %s196, 8
      %s198 = scalar_lea.vmem %s0, %s197
      %p199 = pneg %p37
      %p200 = pneg %p34
      %p201 = pneg %p58
      %p202 = pneg %p55
      %p203 = pneg %p79
      %p204 = pneg %p76
      %p205 = pneg %p100
      %p206 = pneg %p97
      %p207 = pneg %p121
      %p208 = pneg %p118
      %p209 = pneg %p147
      %p210 = pneg %p144
      %s211 = smul.u32 16, %s16
      %p212 = scmp.lt.s32.totalorder %s211, 31
      %s213 = scalar_select %p212, %s211, 31
      %s214 = smul.addr %s213, 8
      %s215 = scalar_lea.vmem %s5, %s214
      %s216 = smul.u32 16, %s16
      %p217 = scmp.lt.s32.totalorder %s216, 31
      %s218 = scalar_select %p217, %s216, 31
      %s219 = smul.addr %s218, 8
      %s220 = scalar_lea.vmem %s0, %s219
      %s221 = smul.u32 16, %s16
      %s222 = smul.u32 16, %s16
      %p223 = scmp.lt.s32.totalorder %s222, 31
      %s224 = scalar_select %p223, %s222, 31
      %s225 = smul.addr %s224, 8
      %s226 = scalar_lea.vmem %s5, %s225
      %s227 = smul.u32 16, %s16
      %v228 = vld [vmem:[%s220] sm:$0xff]
      %v229 = vld [vmem:[%s220 + $0x8] sm:$0xff]
      %v230 = vld [vmem:[%s220 + $0x10] sm:$0xff]
      %v231 = vld [vmem:[%s220 + $0x18] sm:$0xff]
      %v232 = vld [vmem:[%s220 + $0x20] sm:$0xff]
      %v233 = vld [vmem:[%s220 + $0x28] sm:$0xff]
      %v234 = vld [vmem:[%s220 + $0x30] sm:$0xff]
      %v235 = vld [vmem:[%s220 + $0x38] sm:$0xff]
      %v236 = vld [vmem:[%s220 + $0x40] sm:$0xff]
      %v237 = vld [vmem:[%s220 + $0x48] sm:$0xff]
      %v238 = vld [vmem:[%s220 + $0x50] sm:$0xff]
      %v239 = vld [vmem:[%s220 + $0x58] sm:$0xff]
      %v240 = vld [vmem:[%s220 + $0x60] sm:$0xff]
      %v241 = vld [vmem:[%s220 + $0x68] sm:$0xff]
      %v242 = vld [vmem:[%s220 + $0x70] sm:$0xff]
      %v243 = vld [vmem:[%s220 + $0x78] sm:$0xff]
      %v244 = vld [vmem:[%s1] sm:$0xff]
      %v245 = vld [vmem:[%s1 + $0x8] sm:$0xff]
      %v246 = vld [vmem:[%s1 + $0x10] sm:$0xff]
      %v247 = vld [vmem:[%s1 + $0x18] sm:$0xff]
      %v248 = vld [vmem:[%s2] sm:$0x1]
      %v250 = vlaneseq
      %v251 = vshrl.u32 %v250, 7
      %v252 = vsub.s32 0, %v251
      %v253 = vrot.slane %v248, %v252
      %vm255 = vcmask 261120
      %v257 = vsel %vm255, %v228, 0
      %v260 = vsel %vm255, %v229, 0
      %v263 = vsel %vm255, %v230, 0
      %v266 = vsel %vm255, %v231, 0
      %v269 = vsel %vm255, %v232, 0
      %v272 = vsel %vm255, %v233, 0
      %v275 = vsel %vm255, %v234, 0
      %v278 = vsel %vm255, %v235, 0
      %v281 = vsel %vm255, %v236, 0
      %v284 = vsel %vm255, %v237, 0
      %v287 = vsel %vm255, %v238, 0
      %v290 = vsel %vm255, %v239, 0
      %v293 = vsel %vm255, %v240, 0
      %v296 = vsel %vm255, %v241, 0
      %v299 = vsel %vm255, %v242, 0
      %v302 = vsel %vm255, %v243, 0
      %304 = vmatprep.subr.mxu0 0.0
      %305 = vmatpush1.msra.mxu0 %v244
      %306 = vmatprep.subr.mxu0 0.0
      %307 = vmatpush1.msra.mxu0 %v245
      %308 = vmatprep.subr.mxu0 0.0
      %309 = vmatpush1.msra.mxu0 %v246
      %310 = vmatprep.subr.mxu0 0.0
      %311 = vmatpush1.msra.mxu0 %v247
      %312 = vmatprep.subr.mxu0 0.0
      %313 = vmatpush1.msra.mxu0 0.0
      %314 = vmatprep.subr.mxu0 0.0
      %315 = vmatpush1.msra.mxu0 0.0
      %316 = vmatprep.subr.mxu0 0.0
      %317 = vmatpush1.msra.mxu0 0.0
      %318 = vmatprep.subr.mxu0 0.0
      %319 = vmatpush1.msra.mxu0 0.0
      %320 = vmatprep.subr.mxu0 0.0
      %321 = vmatpush1.msra.mxu0 0.0
      %322 = vmatprep.subr.mxu0 0.0
      %323 = vmatpush1.msra.mxu0 0.0
      %324 = vmatprep.subr.mxu0 0.0
      %325 = vmatpush1.msra.mxu0 0.0
      %326 = vmatprep.subr.mxu0 0.0
      %327 = vmatpush1.msra.mxu0 0.0
      %328 = vmatprep.subr.mxu0 0.0
      %329 = vmatpush1.msra.mxu0 0.0
      %330 = vmatprep.subr.mxu0 0.0
      %331 = vmatpush1.msra.mxu0 0.0
      %332 = vmatprep.subr.mxu0 0.0
      %333 = vmatpush1.msra.mxu0 0.0
      %334 = vmatprep.subr.mxu0 0.0
      %335 = vmatpush1.msra.mxu0 0.0
      %336 = vmatprep.subr.mxu0 0.0
      %337 = vmatpush1.msra.mxu0 0.0
      %338 = vmatprep.subr.mxu0 0.0
      %339 = vmatpush1.msra.mxu0 0.0
      %340 = vmatprep.subr.mxu0 0.0
      %341 = vmatpush1.msra.mxu0 0.0
      %342 = vmatprep.subr.mxu0 0.0
      %343 = vmatpush1.msra.mxu0 0.0
      %344 = vmatprep.subr.mxu0 0.0
      %345 = vmatpush1.msra.mxu0 0.0
      %346 = vmatprep.subr.mxu0 0.0
      %347 = vmatpush1.msra.mxu0 0.0
      %348 = vmatprep.subr.mxu0 0.0
      %349 = vmatpush1.msra.mxu0 0.0
      %350 = vmatprep.subr.mxu0 0.0
      %351 = vmatpush1.msra.mxu0 0.0
      %352 = vmatprep.subr.mxu0 0.0
      %353 = vmatpush1.msra.mxu0 0.0
      %354 = vmatprep.subr.mxu0 0.0
      %355 = vmatpush1.msra.mxu0 0.0
      %356 = vmatprep.subr.mxu0 0.0
      %357 = vmatpush1.msra.mxu0 0.0
      %358 = vmatprep.subr.mxu0 0.0
      %359 = vmatpush1.msra.mxu0 0.0
      %360 = vmatprep.subr.mxu0 0.0
      %361 = vmatpush1.msra.mxu0 0.0
      %362 = vmatprep.subr.mxu0 0.0
      %363 = vmatpush1.msra.mxu0 0.0
      %364 = vmatprep.subr.mxu0 0.0
      %365 = vmatpush1.msra.mxu0 0.0
      %366 = vmatprep.subr.mxu0 0.0
      %367 = vmatpush1.msra.mxu0 0.0
      %368 = vmatprep.mubr.f32.mxu0 0.0
      %369 = vmatmul.mubr.f32.gmra.mrb[0].mxu0 %v257
      %v370 = vpop.f32.mrb[0].mxu0
      %v371 = vadd.f32 %v253, %v370
      %v372 = vpop.f32.mrb[0].mxu0
      %373 = vmatprep.mubr.f32.mxu0 0.0
      %374 = vmatmul.mubr.f32.gmra.mrb[0].mxu0 %v260
      %v375 = vpop.f32.mrb[0].mxu0
      %v376 = vadd.f32 %v253, %v375
      %v377 = vpop.f32.mrb[0].mxu0
      %378 = vmatprep.mubr.f32.mxu0 0.0
      %379 = vmatmul.mubr.f32.gmra.mrb[0].mxu0 %v263
      %v380 = vpop.f32.mrb[0].mxu0
      %v381 = vadd.f32 %v253, %v380
      %v382 = vpop.f32.mrb[0].mxu0
      %383 = vmatprep.mubr.f32.mxu0 0.0
      %384 = vmatmul.mubr.f32.gmra.mrb[0].mxu0 %v266
      %v385 = vpop.f32.mrb[0].mxu0
      %v386 = vadd.f32 %v253, %v385
      %v387 = vpop.f32.mrb[0].mxu0
      %388 = vmatprep.mubr.f32.mxu0 0.0
      %389 = vmatmul.mubr.f32.gmra.mrb[0].mxu0 %v269
      %v390 = vpop.f32.mrb[0].mxu0
      %v391 = vadd.f32 %v253, %v390
      %v392 = vpop.f32.mrb[0].mxu0
      %393 = vmatprep.mubr.f32.mxu0 0.0
      %394 = vmatmul.mubr.f32.gmra.mrb[0].mxu0 %v272
      %v395 = vpop.f32.mrb[0].mxu0
      %v396 = vadd.f32 %v253, %v395
      %v397 = vpop.f32.mrb[0].mxu0
      %398 = vmatprep.mubr.f32.mxu0 0.0
      %399 = vmatmul.mubr.f32.gmra.mrb[0].mxu0 %v275
      %v400 = vpop.f32.mrb[0].mxu0
      %v401 = vadd.f32 %v253, %v400
      %v402 = vpop.f32.mrb[0].mxu0
      %403 = vmatprep.mubr.f32.mxu0 0.0
      %404 = vmatmul.mubr.f32.gmra.mrb[0].mxu0 %v278
      %v405 = vpop.f32.mrb[0].mxu0
      %v406 = vadd.f32 %v253, %v405
      %v407 = vpop.f32.mrb[0].mxu0
      %408 = vmatprep.mubr.f32.mxu0 0.0
      %409 = vmatmul.mubr.f32.gmra.mrb[0].mxu0 %v281
      %v410 = vpop.f32.mrb[0].mxu0
      %v411 = vadd.f32 %v253, %v410
      %v412 = vpop.f32.mrb[0].mxu0
      %413 = vmatprep.mubr.f32.mxu0 0.0
      %414 = vmatmul.mubr.f32.gmra.mrb[0].mxu0 %v284
      %v415 = vpop.f32.mrb[0].mxu0
      %v416 = vadd.f32 %v253, %v415
      %v417 = vpop.f32.mrb[0].mxu0
      %418 = vmatprep.mubr.f32.mxu0 0.0
      %419 = vmatmul.mubr.f32.gmra.mrb[0].mxu0 %v287
      %v420 = vpop.f32.mrb[0].mxu0
      %v421 = vadd.f32 %v253, %v420
      %v422 = vpop.f32.mrb[0].mxu0
      %423 = vmatprep.mubr.f32.mxu0 0.0
      %424 = vmatmul.mubr.f32.gmra.mrb[0].mxu0 %v290
      %v425 = vpop.f32.mrb[0].mxu0
      %v426 = vadd.f32 %v253, %v425
      %v427 = vpop.f32.mrb[0].mxu0
      %428 = vmatprep.mubr.f32.mxu0 0.0
      %429 = vmatmul.mubr.f32.gmra.mrb[0].mxu0 %v293
      %v430 = vpop.f32.mrb[0].mxu0
      %v431 = vadd.f32 %v253, %v430
      %v432 = vpop.f32.mrb[0].mxu0
      %433 = vmatprep.mubr.f32.mxu0 0.0
      %434 = vmatmul.mubr.f32.gmra.mrb[0].mxu0 %v296
      %v435 = vpop.f32.mrb[0].mxu0
      %v436 = vadd.f32 %v253, %v435
      %v437 = vpop.f32.mrb[0].mxu0
      %438 = vmatprep.mubr.f32.mxu0 0.0
      %439 = vmatmul.mubr.f32.gmra.mrb[0].mxu0 %v299
      %v440 = vpop.f32.mrb[0].mxu0
      %v441 = vadd.f32 %v253, %v440
      %v442 = vpop.f32.mrb[0].mxu0
      %443 = vmatprep.mubr.f32.mxu0 0.0
      %444 = vmatmul.mubr.f32.gmra.mrb[0].mxu0 %v302
      %v445 = vpop.f32.mrb[0].mxu0
      %v446 = vadd.f32 %v253, %v445
      %v447 = vpop.f32.mrb[0].mxu0
      %448 = vdwg.mxu0
      %v449 = vmax.f32 %v371, 0.0
      %v450 = vmax.f32 %v376, 0.0
      %v451 = vmax.f32 %v381, 0.0
      %v452 = vmax.f32 %v386, 0.0
      %v453 = vmax.f32 %v391, 0.0
      %v454 = vmax.f32 %v396, 0.0
      %v455 = vmax.f32 %v401, 0.0
      %v456 = vmax.f32 %v406, 0.0
      %v457 = vmax.f32 %v411, 0.0
      %v458 = vmax.f32 %v416, 0.0
      %v459 = vmax.f32 %v421, 0.0
      %v460 = vmax.f32 %v426, 0.0
      %v461 = vmax.f32 %v431, 0.0
      %v462 = vmax.f32 %v436, 0.0
      %v463 = vmax.f32 %v441, 0.0
      %v464 = vmax.f32 %v446, 0.0
      %v465 = vld [vmem:[%s3] sm:$0xff]
      %v466 = vld [vmem:[%s3 + $0x8] sm:$0xff]
      %v467 = vld [vmem:[%s3 + $0x10] sm:$0xff]
      %v468 = vld [vmem:[%s3 + $0x18] sm:$0xff]
      %v469 = vld [vmem:[%s4] sm:$0x1]
      %v471 = vlaneseq
      %v472 = vshrl.u32 %v471, 7
      %v473 = vsub.s32 0, %v472
      %v474 = vrot.slane %v469, %v473
      %v477 = vsel %vm255, %v449, 0
      %v480 = vsel %vm255, %v450, 0
      %v483 = vsel %vm255, %v451, 0
      %v486 = vsel %vm255, %v452, 0
      %v489 = vsel %vm255, %v453, 0
      %v492 = vsel %vm255, %v454, 0
      %v495 = vsel %vm255, %v455, 0
      %v498 = vsel %vm255, %v456, 0
      %v501 = vsel %vm255, %v457, 0
      %v504 = vsel %vm255, %v458, 0
      %v507 = vsel %vm255, %v459, 0
      %v510 = vsel %vm255, %v460, 0
      %v513 = vsel %vm255, %v461, 0
      %v516 = vsel %vm255, %v462, 0
      %v519 = vsel %vm255, %v463, 0
      %v522 = vsel %vm255, %v464, 0
      %524 = vmatprep.subr.mxu0 0.0
      %525 = vmatpush1.msra.mxu0 %v465
      %526 = vmatprep.subr.mxu0 0.0
      %527 = vmatpush1.msra.mxu0 %v466
      %528 = vmatprep.subr.mxu0 0.0
      %529 = vmatpush1.msra.mxu0 %v467
      %530 = vmatprep.subr.mxu0 0.0
      %531 = vmatpush1.msra.mxu0 %v468
      %532 = vmatprep.subr.mxu0 0.0
      %533 = vmatpush1.msra.mxu0 0.0
      %534 = vmatprep.subr.mxu0 0.0
      %535 = vmatpush1.msra.mxu0 0.0
      %536 = vmatprep.subr.mxu0 0.0
      %537 = vmatpush1.msra.mxu0 0.0
      %538 = vmatprep.subr.mxu0 0.0
      %539 = vmatpush1.msra.mxu0 0.0
      %540 = vmatprep.subr.mxu0 0.0
      %541 = vmatpush1.msra.mxu0 0.0
      %542 = vmatprep.subr.mxu0 0.0
      %543 = vmatpush1.msra.mxu0 0.0
      %544 = vmatprep.subr.mxu0 0.0
      %545 = vmatpush1.msra.mxu0 0.0
      %546 = vmatprep.subr.mxu0 0.0
      %547 = vmatpush1.msra.mxu0 0.0
      %548 = vmatprep.subr.mxu0 0.0
      %549 = vmatpush1.msra.mxu0 0.0
      %550 = vmatprep.subr.mxu0 0.0
      %551 = vmatpush1.msra.mxu0 0.0
      %552 = vmatprep.subr.mxu0 0.0
      %553 = vmatpush1.msra.mxu0 0.0
      %554 = vmatprep.subr.mxu0 0.0
      %555 = vmatpush1.msra.mxu0 0.0
      %556 = vmatprep.subr.mxu0 0.0
      %557 = vmatpush1.msra.mxu0 0.0
      %558 = vmatprep.subr.mxu0 0.0
      %559 = vmatpush1.msra.mxu0 0.0
      %560 = vmatprep.subr.mxu0 0.0
      %561 = vmatpush1.msra.mxu0 0.0
      %562 = vmatprep.subr.mxu0 0.0
      %563 = vmatpush1.msra.mxu0 0.0
      %564 = vmatprep.subr.mxu0 0.0
      %565 = vmatpush1.msra.mxu0 0.0
      %566 = vmatprep.subr.mxu0 0.0
      %567 = vmatpush1.msra.mxu0 0.0
      %568 = vmatprep.subr.mxu0 0.0
      %569 = vmatpush1.msra.mxu0 0.0
      %570 = vmatprep.subr.mxu0 0.0
      %571 = vmatpush1.msra.mxu0 0.0
      %572 = vmatprep.subr.mxu0 0.0
      %573 = vmatpush1.msra.mxu0 0.0
      %574 = vmatprep.subr.mxu0 0.0
      %575 = vmatpush1.msra.mxu0 0.0
      %576 = vmatprep.subr.mxu0 0.0
      %577 = vmatpush1.msra.mxu0 0.0
      %578 = vmatprep.subr.mxu0 0.0
      %579 = vmatpush1.msra.mxu0 0.0
      %580 = vmatprep.subr.mxu0 0.0
      %581 = vmatpush1.msra.mxu0 0.0
      %582 = vmatprep.subr.mxu0 0.0
      %583 = vmatpush1.msra.mxu0 0.0
      %584 = vmatprep.subr.mxu0 0.0
      %585 = vmatpush1.msra.mxu0 0.0
      %586 = vmatprep.subr.mxu0 0.0
      %587 = vmatpush1.msra.mxu0 0.0
      %588 = vmatprep.mubr.f32.mxu0 0.0
      %589 = vmatmul.mubr.f32.gmra.mrb[0].mxu0 %v477
      %v590 = vpop.f32.mrb[0].mxu0
      %v591 = vadd.f32 %v474, %v590
      %v592 = vpop.f32.mrb[0].mxu0
      %593 = vmatprep.mubr.f32.mxu0 0.0
      %594 = vmatmul.mubr.f32.gmra.mrb[0].mxu0 %v480
      %v595 = vpop.f32.mrb[0].mxu0
      %v596 = vadd.f32 %v474, %v595
      %v597 = vpop.f32.mrb[0].mxu0
      %598 = vmatprep.mubr.f32.mxu0 0.0
      %599 = vmatmul.mubr.f32.gmra.mrb[0].mxu0 %v483
      %v600 = vpop.f32.mrb[0].mxu0
      %v601 = vadd.f32 %v474, %v600
      %v602 = vpop.f32.mrb[0].mxu0
      %603 = vmatprep.mubr.f32.mxu0 0.0
      %604 = vmatmul.mubr.f32.gmra.mrb[0].mxu0 %v486
      %v605 = vpop.f32.mrb[0].mxu0
      %v606 = vadd.f32 %v474, %v605
      %v607 = vpop.f32.mrb[0].mxu0
      %608 = vmatprep.mubr.f32.mxu0 0.0
      %609 = vmatmul.mubr.f32.gmra.mrb[0].mxu0 %v489
      %v610 = vpop.f32.mrb[0].mxu0
      %v611 = vadd.f32 %v474, %v610
      %v612 = vpop.f32.mrb[0].mxu0
      %613 = vmatprep.mubr.f32.mxu0 0.0
      %614 = vmatmul.mubr.f32.gmra.mrb[0].mxu0 %v492
      %v615 = vpop.f32.mrb[0].mxu0
      %v616 = vadd.f32 %v474, %v615
      %v617 = vpop.f32.mrb[0].mxu0
      %618 = vmatprep.mubr.f32.mxu0 0.0
      %619 = vmatmul.mubr.f32.gmra.mrb[0].mxu0 %v495
      %v620 = vpop.f32.mrb[0].mxu0
      %v621 = vadd.f32 %v474, %v620
      %v622 = vpop.f32.mrb[0].mxu0
      %623 = vmatprep.mubr.f32.mxu0 0.0
      %624 = vmatmul.mubr.f32.gmra.mrb[0].mxu0 %v498
      %v625 = vpop.f32.mrb[0].mxu0
      %v626 = vadd.f32 %v474, %v625
      %v627 = vpop.f32.mrb[0].mxu0
      %628 = vmatprep.mubr.f32.mxu0 0.0
      %629 = vmatmul.mubr.f32.gmra.mrb[0].mxu0 %v501
      %v630 = vpop.f32.mrb[0].mxu0
      %v631 = vadd.f32 %v474, %v630
      %v632 = vpop.f32.mrb[0].mxu0
      %633 = vmatprep.mubr.f32.mxu0 0.0
      %634 = vmatmul.mubr.f32.gmra.mrb[0].mxu0 %v504
      %v635 = vpop.f32.mrb[0].mxu0
      %v636 = vadd.f32 %v474, %v635
      %v637 = vpop.f32.mrb[0].mxu0
      %638 = vmatprep.mubr.f32.mxu0 0.0
      %639 = vmatmul.mubr.f32.gmra.mrb[0].mxu0 %v507
      %v640 = vpop.f32.mrb[0].mxu0
      %v641 = vadd.f32 %v474, %v640
      %v642 = vpop.f32.mrb[0].mxu0
      %643 = vmatprep.mubr.f32.mxu0 0.0
      %644 = vmatmul.mubr.f32.gmra.mrb[0].mxu0 %v510
      %v645 = vpop.f32.mrb[0].mxu0
      %v646 = vadd.f32 %v474, %v645
      %v647 = vpop.f32.mrb[0].mxu0
      %648 = vmatprep.mubr.f32.mxu0 0.0
      %649 = vmatmul.mubr.f32.gmra.mrb[0].mxu0 %v513
      %v650 = vpop.f32.mrb[0].mxu0
      %v651 = vadd.f32 %v474, %v650
      %v652 = vpop.f32.mrb[0].mxu0
      %653 = vmatprep.mubr.f32.mxu0 0.0
      %654 = vmatmul.mubr.f32.gmra.mrb[0].mxu0 %v516
      %v655 = vpop.f32.mrb[0].mxu0
      %v656 = vadd.f32 %v474, %v655
      %v657 = vpop.f32.mrb[0].mxu0
      %658 = vmatprep.mubr.f32.mxu0 0.0
      %659 = vmatmul.mubr.f32.gmra.mrb[0].mxu0 %v519
      %v660 = vpop.f32.mrb[0].mxu0
      %v661 = vadd.f32 %v474, %v660
      %v662 = vpop.f32.mrb[0].mxu0
      %663 = vmatprep.mubr.f32.mxu0 0.0
      %664 = vmatmul.mubr.f32.gmra.mrb[0].mxu0 %v522
      %v665 = vpop.f32.mrb[0].mxu0
      %v666 = vadd.f32 %v474, %v665
      %v667 = vpop.f32.mrb[0].mxu0
      %668 = vdwg.mxu0
      %vm669 = vcmask 130048
      %670 = vst.msk [vmem:[%s226] sm:$0xff] %vm669, %v591
      %671 = vst.msk [vmem:[%s226 + $0x8] sm:$0xff] %vm669, %v596
      %672 = vst.msk [vmem:[%s226 + $0x10] sm:$0xff] %vm669, %v601
      %673 = vst.msk [vmem:[%s226 + $0x18] sm:$0xff] %vm669, %v606
      %674 = vst.msk [vmem:[%s226 + $0x20] sm:$0xff] %vm669, %v611
      %675 = vst.msk [vmem:[%s226 + $0x28] sm:$0xff] %vm669, %v616
      %676 = vst.msk [vmem:[%s226 + $0x30] sm:$0xff] %vm669, %v621
      %677 = vst.msk [vmem:[%s226 + $0x38] sm:$0xff] %vm669, %v626
      %678 = vst.msk [vmem:[%s226 + $0x40] sm:$0xff] %vm669, %v631
      %679 = vst.msk [vmem:[%s226 + $0x48] sm:$0xff] %vm669, %v636
      %680 = vst.msk [vmem:[%s226 + $0x50] sm:$0xff] %vm669, %v641
      %681 = vst.msk [vmem:[%s226 + $0x58] sm:$0xff] %vm669, %v646
      %682 = vst.msk [vmem:[%s226 + $0x60] sm:$0xff] %vm669, %v651
      %683 = vst.msk [vmem:[%s226 + $0x68] sm:$0xff] %vm669, %v656
      %684 = vst.msk [vmem:[%s226 + $0x70] sm:$0xff] %vm669, %v661
      %685 = vst.msk [vmem:[%s226 + $0x78] sm:$0xff] %vm669, %v666
      %s686 = smul.u32 16, %s16
      %p687 = scmp.lt.s32.totalorder %s686, 31
      %s688 = scalar_select %p687, %s686, 31
      %s689 = smul.addr %s688, 8
      %s690 = scalar_lea.vmem %s5, %s689
      // Predicated region
      $region41: #{linregnet_forward.1} parent=39 // pred_check
        %p691 = pneg %p144
      $region42: #{linregnet_forward.1} parent=39 // pred_check_branch
        %693 = sbr.rel (%p691) target = $region44
      $region43: #{linregnet_forward.1} parent=39 // pred_region
        %s694 = smul.u32 16, %s16
      $region44: #{linregnet_forward.1} parent=39 // pred_fallthru
        _
    $region40: #{linregnet_forward.1} parent=5 // pred_fallthru
      _
    %p695 = scmp.le.s32.totalorder 2, %s11
    // Predicated region
    $region45: #{linregnet_forward.1} parent=5 // pred_check
      %p696 = pneg %p695
    $region46: #{linregnet_forward.1} parent=5 // pred_check_branch
      %698 = sbr.rel (%p696) target = $region48
    $region47: #{linregnet_forward.1} parent=5 // pred_region
      %s699 = ssub.s32 %s11, 2
      // Predicated region
      $region49: #{linregnet_forward.1} parent=47 // pred_check
        %p700 = pneg %p150
      $region50: #{linregnet_forward.1} parent=47 // pred_check_branch
        %702 = sbr.rel (%p700) target = $region52
      $region51: #{linregnet_forward.1} parent=47 // pred_region
        %s703 = smul.u32 16, %s17
        %p704 = scmp.lt.s32.totalorder %s703, 31
        %s705 = scalar_select %p704, %s703, 31
        %s706 = smul.addr %s705, 8
        %s707 = scalar_lea.vmem %s5, %s706
      $region52: #{linregnet_forward.1} parent=47 // pred_fallthru
        _
    $region48: #{linregnet_forward.1} parent=5 // pred_fallthru
      _
  $region6: #{linregnet_forward.1} parent=0 // loop_footer
    %s15 = sadd.s32 1, %s11
  $region7: #{linregnet_forward.1} parent=0 // loop_footer_branch
    %10 = sbr.rel target = $region3
  $region8: #{linregnet_forward.1} parent=0 // loop_exit
    _

</llo_original>
